<compile_context>
chip_gen: v5e
topology: v5e:2x2
jax: 0.10.0
libtpu: 0.0.40
codegen_flags: <defaults>
</compile_context>

<pallas_src>
import functools
import math

import jax
import jax.numpy as jnp
from jax import lax
from jax.experimental import pallas as pl
from jax.experimental.pallas import tpu as pltpu


def mha_kernel(x_ref, wqkv_ref, bqkv_ref, wout_ref, bout_ref, o_ref,
               qkv_ref, attn_ref, *, num_heads, head_dim, q_tile, heads_per_group):
    # x_ref:    (1, T, C)   full sequence of the current batch element (resident across q tiles)
    # wqkv_ref: (C, 3C)     qkv_proj.weight, pre-transposed, Q columns pre-scaled by 1/sqrt(Dh)
    # bqkv_ref: (1, 3C)     qkv_proj.bias,  Q part pre-scaled
    # wout_ref: (C, C)      out_proj.weight, pre-transposed
    # bout_ref: (1, C)      out_proj.bias
    # o_ref:    (1, tq, C)  output tile
    # qkv_ref:  (T, 3C)     persistent VMEM scratch, compute dtype (QKV projected once per batch)
    # attn_ref: (tq, C)     VMEM scratch, compute dtype (concatenated head outputs)
    compute_dtype = x_ref.dtype
    C = x_ref.shape[2]
    Dh = head_dim
    tq = q_tile
    qt = pl.program_id(1)

    # ---- QKV projection hoisted out of the q-tile axis: once per batch element. ----
    @pl.when(qt == 0)
    def _project_qkv():
        x = x_ref[0]                                                       # (T, C)
        qkv = jnp.dot(x, wqkv_ref[...],
                      preferred_element_type=jnp.float32) + bqkv_ref[...]  # (T, 3C) f32
        qkv_ref[...] = qkv.astype(compute_dtype)                           # lane-dense store

    # Query rows of this tile (already scaled by 1/sqrt(Dh) via the host-folded weights).
    row0 = pl.multiple_of(qt * tq, tq)
    q_rows = qkv_ref[pl.ds(row0, tq), 0:C]                                 # (tq, C)

    # ---- Per-head attention; heads grouped so attn-scratch stores are >=128-lane slabs. ----
    for g0 in range(0, num_heads, heads_per_group):
        group_out = []
        for h in range(g0, g0 + heads_per_group):
            q = q_rows[:, h * Dh:(h + 1) * Dh]                             # (tq, Dh)
            k = qkv_ref[:, C + h * Dh:C + (h + 1) * Dh]                    # (T, Dh)
            v = qkv_ref[:, 2 * C + h * Dh:2 * C + (h + 1) * Dh]            # (T, Dh)

            # q @ k.T without materializing a transposed copy of k; accumulate in f32.
            s = lax.dot_general(q, k, dimension_numbers=(((1,), (1,)), ((), ())),
                                preferred_element_type=jnp.float32)        # (tq, T)

            # Softmax in f32 (max-subtracted); the divide is folded into the head output.
            s = s - jnp.max(s, axis=-1, keepdims=True)
            p = jnp.exp(s)
            l = jnp.sum(p, axis=-1, keepdims=True)                         # (tq, 1)

            o_h = jnp.dot(p.astype(compute_dtype), v,
                          preferred_element_type=jnp.float32)              # (tq, Dh)
            inv_l = pl.reciprocal(l, approx=True)                          # EUP approx recip
            group_out.append((o_h * inv_l).astype(compute_dtype))

        slab = group_out[0] if len(group_out) == 1 else jnp.concatenate(group_out, axis=-1)
        attn_ref[:, g0 * Dh:(g0 + heads_per_group) * Dh] = slab            # aligned slab store

    # ---- Output projection on the compute-dtype attn tile. ----
    out = jnp.dot(attn_ref[...], wout_ref[...],
                  preferred_element_type=jnp.float32) + bout_ref[...]      # (tq, C) f32
    o_ref[0] = out.astype(o_ref.dtype)


def _pick_heads_per_group(num_heads: int, head_dim: int) -> int:
    """Smallest head-group size whose lane width reaches ~128 and divides num_heads."""
    if head_dim % 128 == 0:
        return 1
    g = min(num_heads, max(1, -(-128 // head_dim)))   # ceil(128 / head_dim), capped at H
    while num_heads % g != 0 and g < num_heads:
        g += 1
    return g


def _pick_q_tile(T: int, C: int, itemsize: int) -> int:
    """Largest q tile dividing T whose per-tile working set stays within a modest VMEM slice
    (leaves room for the resident (T, 3C) QKV scratch and the weights)."""
    budget = 12 << 20
    for cand in (512, 256, 128, 64, 32, 16, 8):
        if T % cand == 0:
            per_tile = cand * T * 8 + 4 * cand * C * itemsize   # f32 scores+probs, attn/out tiles
            if per_tile <= budget:
                return cand
    return T


def multi_head_attention(x, wqkv, bqkv, wout, bout, num_heads):
    B, T, C = x.shape
    assert C % num_heads == 0
    head_dim = C // num_heads
    H = num_heads

    itemsize = jnp.dtype(x.dtype).itemsize
    tq = _pick_q_tile(T, C, itemsize)
    n_qt = T // tq
    heads_per_group = _pick_heads_per_group(num_heads, head_dim)

    # Pre-transpose Linear weights (torch stores (out, in)) and fold 1/sqrt(Dh) into the Q
    # columns of the QKV weight/bias so the kernel never scales the (tq, C) activations.
    scale = 1.0 / math.sqrt(head_dim)
    wqkv_t = wqkv.T                                        # (C, 3C)
    wqkv_t = wqkv_t.at[:, :C].multiply(scale)
    bqkv_s = bqkv.at[:C].multiply(scale).reshape(1, 3 * C)  # (1, 3C)
    wout_t = wout.T                                        # (C, C)
    bout2 = bout.reshape(1, C)                             # (1, C)

    kernel = functools.partial(mha_kernel, num_heads=num_heads, head_dim=head_dim,
                               q_tile=tq, heads_per_group=heads_per_group)

    # Advisory cost estimate (QKV projection now counted once per batch element).
    flops = (2 * B * T * C * (3 * C)          # qkv projection (once per batch element)
             + 4 * B * H * T * T * head_dim   # q@k.T and p@v
             + 2 * B * T * C * C)             # out projection
    transcendentals = B * H * T * T           # exp in softmax
    bytes_accessed = (x.size + wqkv.size + bqkv.size + wout.size + bout.size
                      + B * T * C) * itemsize

    # Explicit VMEM budget (double-buffered blocks + persistent scratches + f32 temporaries).
    vmem_est = (2 * T * C * itemsize            # x block (double-buffered)
                + 2 * tq * C * itemsize         # out block (double-buffered)
                + 2 * (3 * C * C + C * C + 4 * C) * itemsize   # weights/biases (double-buffered)
                + 3 * T * C * itemsize          # QKV scratch
                + tq * C * itemsize             # attn scratch
                + 3 * T * C * 4                 # f32 projection intermediate (qt == 0)
                + 2 * tq * T * 4)               # f32 scores + probs for one head
    vmem_limit = int(min(max(vmem_est + vmem_est // 2, 32 << 20), 64 << 20))

    return pl.pallas_call(
        kernel,
        out_shape=jax.ShapeDtypeStruct((B, T, C), x.dtype),
        grid=(B, n_qt),
        in_specs=[
            pl.BlockSpec((1, T, C), lambda b, qt: (b, 0, 0)),        # full sequence (Q rows + K/V)
            pl.BlockSpec((C, 3 * C), lambda b, qt: (0, 0)),          # qkv weight (pre-transposed)
            pl.BlockSpec((1, 3 * C), lambda b, qt: (0, 0)),          # qkv bias
            pl.BlockSpec((C, C), lambda b, qt: (0, 0)),              # out weight (pre-transposed)
            pl.BlockSpec((1, C), lambda b, qt: (0, 0)),              # out bias
        ],
        out_specs=pl.BlockSpec((1, tq, C), lambda b, qt: (b, qt, 0)),
        scratch_shapes=[
            pltpu.VMEM((T, 3 * C), x.dtype),   # persistent QKV projection (per batch element)
            pltpu.VMEM((tq, C), x.dtype),      # concatenated head outputs (compute dtype)
        ],
        compiler_params=pltpu.CompilerParams(
            dimension_semantics=("parallel", "arbitrary"),
            vmem_limit_bytes=vmem_limit),
        cost_estimate=pl.CostEstimate(
            flops=flops, transcendentals=transcendentals, bytes_accessed=bytes_accessed),
    )(x, wqkv_t, bqkv_s, wout_t, bout2)


def reference_mha(x, wqkv, bqkv, wout, bout, num_heads):
    B, T, C = x.shape
    Dh = C // num_heads
    qkv = x @ wqkv.T + bqkv                               # (B, T, 3C)
    qkv = qkv.reshape(B, T, 3, num_heads, Dh)
    q, k, v = qkv[:, :, 0], qkv[:, :, 1], qkv[:, :, 2]    # (B, T, H, Dh)
    q = jnp.transpose(q, (0, 2, 1, 3))
    k = jnp.transpose(k, (0, 2, 1, 3))
    v = jnp.transpose(v, (0, 2, 1, 3))
    s = jnp.einsum("bhqd,bhkd->bhqk", q, k) / math.sqrt(Dh)
    p = jax.nn.softmax(s, axis=-1)
    o = jnp.einsum("bhqk,bhkd->bhqd", p, v)
    o = jnp.transpose(o, (0, 2, 1, 3)).reshape(B, T, C)
    return o @ wout.T + bout


if __name__ == "__main__":
    B, T, d_model, num_heads = 2, 8, 32, 4

    key = jax.random.PRNGKey(0)
    kx, k1, k2, k3, k4 = jax.random.split(key, 5)

    x = jax.random.normal(kx, (B, T, d_model), dtype=jnp.float32)

    # Deterministic init mimicking torch.nn.Linear default: U(-1/sqrt(fan_in), 1/sqrt(fan_in)).
    bound = 1.0 / math.sqrt(d_model)
    wqkv = jax.random.uniform(k1, (3 * d_model, d_model), jnp.float32, -bound, bound)
    bqkv = jax.random.uniform(k2, (3 * d_model,), jnp.float32, -bound, bound)
    wout = jax.random.uniform(k3, (d_model, d_model), jnp.float32, -bound, bound)
    bout = jax.random.uniform(k4, (d_model,), jnp.float32, -bound, bound)

    out = multi_head_attention(x, wqkv, bqkv, wout, bout, num_heads)
    out = jax.block_until_ready(out)

    ref = reference_mha(x, wqkv, bqkv, wout, bout, num_heads)
    assert out.shape == (B, T, d_model)
    # Tolerance slightly looser than exact f32 because the softmax denominator uses the EUP
    # approximate reciprocal (pl.reciprocal(approx=True)).
    assert jnp.allclose(out, ref, atol=2e-3, rtol=2e-3), "Pallas output mismatch vs reference"

    print("KERNEL_OK")
</pallas_src>

<mosaic_0001>
module attributes {stable_mosaic.version = 11 : i64} {
  func.func @mha_kernel(%arg0: i32, %arg1: i32, %arg2: memref<1x8x32xf32, #tpu.memory_space<vmem>>, %arg3: memref<32x96xf32, #tpu.memory_space<vmem>>, %arg4: memref<1x96xf32, #tpu.memory_space<vmem>>, %arg5: memref<32x32xf32, #tpu.memory_space<vmem>>, %arg6: memref<1x32xf32, #tpu.memory_space<vmem>>, %arg7: memref<1x8x32xf32, #tpu.memory_space<vmem>>, %arg8: memref<8x96xf32, #tpu.memory_space<vmem>>, %arg9: memref<8x32xf32, #tpu.memory_space<vmem>>) attributes {dimension_semantics = [#tpu.dimension_semantics<parallel>, #tpu.dimension_semantics<arbitrary>], iteration_bounds = array<i64: 2, 1>, scalar_prefetch = 0 : i64, scratch_operands = 2 : i64, tpu.core_type = #tpu.core_type<tc>, window_params = [{transform_indices = @transform_0, window_bounds = array<i64: 1, 8, 32>}, {pipeline_mode = #tpu.pipeline_mode<synchronous>, transform_indices = @transform_1, window_bounds = array<i64: 32, 96>}, {pipeline_mode = #tpu.pipeline_mode<synchronous>, transform_indices = @transform_2, window_bounds = array<i64: 1, 96>}, {pipeline_mode = #tpu.pipeline_mode<synchronous>, transform_indices = @transform_3, window_bounds = array<i64: 32, 32>}, {pipeline_mode = #tpu.pipeline_mode<synchronous>, transform_indices = @transform_4, window_bounds = array<i64: 1, 32>}, {transform_indices = @transform_5, window_bounds = array<i64: 1, 8, 32>}]} {
    %c0_i32 = arith.constant 0 : i32
    %0 = arith.cmpi eq, %arg1, %c0_i32 : i32
    %1 = arith.extui %0 : i1 to i32
    %c0_i32_0 = arith.constant 0 : i32
    %2 = arith.cmpi ne, %1, %c0_i32_0 : i32
    scf.if %2 {
      %c0_36 = arith.constant 0 : index
      %c0_37 = arith.constant 0 : index
      %c0_38 = arith.constant 0 : index
      %78 = vector.load %arg2[%c0_36, %c0_37, %c0_38] : memref<1x8x32xf32, #tpu.memory_space<vmem>>, vector<1x8x32xf32>
      %79 = vector.shape_cast %78 : vector<1x8x32xf32> to vector<8x32xf32>
      %c0_39 = arith.constant 0 : index
      %c0_40 = arith.constant 0 : index
      %80 = vector.load %arg3[%c0_39, %c0_40] : memref<32x96xf32, #tpu.memory_space<vmem>>, vector<32x96xf32>
      %cst_41 = arith.constant dense<0.000000e+00> : vector<8x96xf32>
      %81 = tpu.matmul %79, %80, %cst_41 {dimension_numbers = #tpu.dot_dimension_numbers<[1], [0], [0], [1], [0, 0, 1, 1], [], []>} : vector<8x32xf32>, vector<32x96xf32>, vector<8x96xf32> -> vector<8x96xf32>
      %c0_42 = arith.constant 0 : index
      %c0_43 = arith.constant 0 : index
      %82 = vector.load %arg4[%c0_42, %c0_43] : memref<1x96xf32, #tpu.memory_space<vmem>>, vector<1x96xf32>
      %83 = vector.broadcast %82 : vector<1x96xf32> to vector<8x96xf32>
      %84 = arith.addf %81, %83 : vector<8x96xf32>
      %c0_44 = arith.constant 0 : index
      %c0_45 = arith.constant 0 : index
      %85 = vector.load %arg8[%c0_44, %c0_45] : memref<8x96xf32, #tpu.memory_space<vmem>>, vector<8x96xf32>
      tpu.vector_store %arg8[%c0_44, %c0_45], %84 {strides = array<i32>} : memref<8x96xf32, #tpu.memory_space<vmem>>, vector<8x96xf32>,
    } else {
    }
    %c8_i32 = arith.constant 8 : i32
    %3 = arith.muli %arg1, %c8_i32 : i32
    %4 = tpu.assume_multiple %3, 8 : i32
    %5 = arith.index_cast %4 : i32 to index
    %c0 = arith.constant 0 : index
    %6 = vector.load %arg8[%5, %c0] : memref<8x96xf32, #tpu.memory_space<vmem>>, vector<8x32xf32>
    %7 = vector.extract_strided_slice %6 {offsets = [0, 0], sizes = [8, 8], strides = [1, 1]} : vector<8x32xf32> to vector<8x8xf32>
    %c0_1 = arith.constant 0 : index
    %c32 = arith.constant 32 : index
    %8 = vector.load %arg8[%c0_1, %c32] : memref<8x96xf32, #tpu.memory_space<vmem>>, vector<8x8xf32>
    %c0_2 = arith.constant 0 : index
    %c64 = arith.constant 64 : index
    %9 = vector.load %arg8[%c0_2, %c64] : memref<8x96xf32, #tpu.memory_space<vmem>>, vector<8x8xf32>
    %cst = arith.constant dense<0.000000e+00> : vector<8x8xf32>
    %10 = tpu.matmul %7, %8, %cst {dimension_numbers = #tpu.dot_dimension_numbers<[1], [1], [0], [0], [0, 0, 1, 0], [], []>} : vector<8x8xf32>, vector<8x8xf32>, vector<8x8xf32> -> vector<8x8xf32>
    %cst_3 = arith.constant dense<0xFF800000> : vector<8xf32>
    %11 = vector.multi_reduction <maximumf>, %10, %cst_3 [1] : vector<8x8xf32> to vector<8xf32>
    %12 = vector.shape_cast %11 : vector<8xf32> to vector<8x1xf32>
    %13 = vector.broadcast %12 : vector<8x1xf32> to vector<8x8xf32>
    %14 = arith.subf %10, %13 : vector<8x8xf32>
    %15 = math.exp %14 : vector<8x8xf32>
    %cst_4 = arith.constant dense<0.000000e+00> : vector<8xf32>
    %16 = vector.multi_reduction <add>, %15, %cst_4 [1] : vector<8x8xf32> to vector<8xf32>
    %17 = vector.shape_cast %16 : vector<8xf32> to vector<8x1xf32>
    %cst_5 = arith.constant dense<0.000000e+00> : vector<8x8xf32>
    %18 = tpu.matmul %15, %9, %cst_5 {dimension_numbers = #tpu.dot_dimension_numbers<[1], [0], [0], [1], [0, 0, 1, 1], [], []>} : vector<8x8xf32>, vector<8x8xf32>, vector<8x8xf32> -> vector<8x8xf32>
    %19 = tpu.reciprocal %17 {approx = true} : vector<8x1xf32> -> vector<8x1xf32>
    %20 = vector.broadcast %19 : vector<8x1xf32> to vector<8x8xf32>
    %21 = arith.mulf %18, %20 : vector<8x8xf32>
    %22 = vector.extract_strided_slice %6 {offsets = [0, 8], sizes = [8, 8], strides = [1, 1]} : vector<8x32xf32> to vector<8x8xf32>
    %c0_6 = arith.constant 0 : index
    %c40 = arith.constant 40 : index
    %23 = vector.load %arg8[%c0_6, %c40] : memref<8x96xf32, #tpu.memory_space<vmem>>, vector<8x8xf32>
    %c0_7 = arith.constant 0 : index
    %c72 = arith.constant 72 : index
    %24 = vector.load %arg8[%c0_7, %c72] : memref<8x96xf32, #tpu.memory_space<vmem>>, vector<8x8xf32>
    %cst_8 = arith.constant dense<0.000000e+00> : vector<8x8xf32>
    %25 = tpu.matmul %22, %23, %cst_8 {dimension_numbers = #tpu.dot_dimension_numbers<[1], [1], [0], [0], [0, 0, 1, 0], [], []>} : vector<8x8xf32>, vector<8x8xf32>, vector<8x8xf32> -> vector<8x8xf32>
    %cst_9 = arith.constant dense<0xFF800000> : vector<8xf32>
    %26 = vector.multi_reduction <maximumf>, %25, %cst_9 [1] : vector<8x8xf32> to vector<8xf32>
    %27 = vector.shape_cast %26 : vector<8xf32> to vector<8x1xf32>
    %28 = vector.broadcast %27 : vector<8x1xf32> to vector<8x8xf32>
    %29 = arith.subf %25, %28 : vector<8x8xf32>
    %30 = math.exp %29 : vector<8x8xf32>
    %cst_10 = arith.constant dense<0.000000e+00> : vector<8xf32>
    %31 = vector.multi_reduction <add>, %30, %cst_10 [1] : vector<8x8xf32> to vector<8xf32>
    %32 = vector.shape_cast %31 : vector<8xf32> to vector<8x1xf32>
    %cst_11 = arith.constant dense<0.000000e+00> : vector<8x8xf32>
    %33 = tpu.matmul %30, %24, %cst_11 {dimension_numbers = #tpu.dot_dimension_numbers<[1], [0], [0], [1], [0, 0, 1, 1], [], []>} : vector<8x8xf32>, vector<8x8xf32>, vector<8x8xf32> -> vector<8x8xf32>
    %34 = tpu.reciprocal %32 {approx = true} : vector<8x1xf32> -> vector<8x1xf32>
    %35 = vector.broadcast %34 : vector<8x1xf32> to vector<8x8xf32>
    %36 = arith.mulf %33, %35 : vector<8x8xf32>
    %37 = vector.extract_strided_slice %6 {offsets = [0, 16], sizes = [8, 8], strides = [1, 1]} : vector<8x32xf32> to vector<8x8xf32>
    %c0_12 = arith.constant 0 : index
    %c48 = arith.constant 48 : index
    %38 = vector.load %arg8[%c0_12, %c48] : memref<8x96xf32, #tpu.memory_space<vmem>>, vector<8x8xf32>
    %c0_13 = arith.constant 0 : index
    %c80 = arith.constant 80 : index
    %39 = vector.load %arg8[%c0_13, %c80] : memref<8x96xf32, #tpu.memory_space<vmem>>, vector<8x8xf32>
    %cst_14 = arith.constant dense<0.000000e+00> : vector<8x8xf32>
    %40 = tpu.matmul %37, %38, %cst_14 {dimension_numbers = #tpu.dot_dimension_numbers<[1], [1], [0], [0], [0, 0, 1, 0], [], []>} : vector<8x8xf32>, vector<8x8xf32>, vector<8x8xf32> -> vector<8x8xf32>
    %cst_15 = arith.constant dense<0xFF800000> : vector<8xf32>
    %41 = vector.multi_reduction <maximumf>, %40, %cst_15 [1] : vector<8x8xf32> to vector<8xf32>
    %42 = vector.shape_cast %41 : vector<8xf32> to vector<8x1xf32>
    %43 = vector.broadcast %42 : vector<8x1xf32> to vector<8x8xf32>
    %44 = arith.subf %40, %43 : vector<8x8xf32>
    %45 = math.exp %44 : vector<8x8xf32>
    %cst_16 = arith.constant dense<0.000000e+00> : vector<8xf32>
    %46 = vector.multi_reduction <add>, %45, %cst_16 [1] : vector<8x8xf32> to vector<8xf32>
    %47 = vector.shape_cast %46 : vector<8xf32> to vector<8x1xf32>
    %cst_17 = arith.constant dense<0.000000e+00> : vector<8x8xf32>
    %48 = tpu.matmul %45, %39, %cst_17 {dimension_numbers = #tpu.dot_dimension_numbers<[1], [0], [0], [1], [0, 0, 1, 1], [], []>} : vector<8x8xf32>, vector<8x8xf32>, vector<8x8xf32> -> vector<8x8xf32>
    %49 = tpu.reciprocal %47 {approx = true} : vector<8x1xf32> -> vector<8x1xf32>
    %50 = vector.broadcast %49 : vector<8x1xf32> to vector<8x8xf32>
    %51 = arith.mulf %48, %50 : vector<8x8xf32>
    %52 = vector.extract_strided_slice %6 {offsets = [0, 24], sizes = [8, 8], strides = [1, 1]} : vector<8x32xf32> to vector<8x8xf32>
    %c0_18 = arith.constant 0 : index
    %c56 = arith.constant 56 : index
    %53 = vector.load %arg8[%c0_18, %c56] : memref<8x96xf32, #tpu.memory_space<vmem>>, vector<8x8xf32>
    %c0_19 = arith.constant 0 : index
    %c88 = arith.constant 88 : index
    %54 = vector.load %arg8[%c0_19, %c88] : memref<8x96xf32, #tpu.memory_space<vmem>>, vector<8x8xf32>
    %cst_20 = arith.constant dense<0.000000e+00> : vector<8x8xf32>
    %55 = tpu.matmul %52, %53, %cst_20 {dimension_numbers = #tpu.dot_dimension_numbers<[1], [1], [0], [0], [0, 0, 1, 0], [], []>} : vector<8x8xf32>, vector<8x8xf32>, vector<8x8xf32> -> vector<8x8xf32>
    %cst_21 = arith.constant dense<0xFF800000> : vector<8xf32>
    %56 = vector.multi_reduction <maximumf>, %55, %cst_21 [1] : vector<8x8xf32> to vector<8xf32>
    %57 = vector.shape_cast %56 : vector<8xf32> to vector<8x1xf32>
    %58 = vector.broadcast %57 : vector<8x1xf32> to vector<8x8xf32>
    %59 = arith.subf %55, %58 : vector<8x8xf32>
    %60 = math.exp %59 : vector<8x8xf32>
    %cst_22 = arith.constant dense<0.000000e+00> : vector<8xf32>
    %61 = vector.multi_reduction <add>, %60, %cst_22 [1] : vector<8x8xf32> to vector<8xf32>
    %62 = vector.shape_cast %61 : vector<8xf32> to vector<8x1xf32>
    %cst_23 = arith.constant dense<0.000000e+00> : vector<8x8xf32>
    %63 = tpu.matmul %60, %54, %cst_23 {dimension_numbers = #tpu.dot_dimension_numbers<[1], [0], [0], [1], [0, 0, 1, 1], [], []>} : vector<8x8xf32>, vector<8x8xf32>, vector<8x8xf32> -> vector<8x8xf32>
    %64 = tpu.reciprocal %62 {approx = true} : vector<8x1xf32> -> vector<8x1xf32>
    %65 = vector.broadcast %64 : vector<8x1xf32> to vector<8x8xf32>
    %66 = arith.mulf %63, %65 : vector<8x8xf32>
    %67 = tpu.concatenate %21, %36, %51, %66 in 1 : vector<8x8xf32>, vector<8x8xf32>, vector<8x8xf32>, vector<8x8xf32> -> vector<8x32xf32>
    %c0_24 = arith.constant 0 : index
    %c0_25 = arith.constant 0 : index
    %68 = vector.load %arg9[%c0_24, %c0_25] : memref<8x32xf32, #tpu.memory_space<vmem>>, vector<8x32xf32>
    tpu.vector_store %arg9[%c0_24, %c0_25], %67 {strides = array<i32>} : memref<8x32xf32, #tpu.memory_space<vmem>>, vector<8x32xf32>,
    %c0_26 = arith.constant 0 : index
    %c0_27 = arith.constant 0 : index
    %69 = vector.load %arg9[%c0_26, %c0_27] : memref<8x32xf32, #tpu.memory_space<vmem>>, vector<8x32xf32>
    %c0_28 = arith.constant 0 : index
    %c0_29 = arith.constant 0 : index
    %70 = vector.load %arg5[%c0_28, %c0_29] : memref<32x32xf32, #tpu.memory_space<vmem>>, vector<32x32xf32>
    %cst_30 = arith.constant dense<0.000000e+00> : vector<8x32xf32>
    %71 = tpu.matmul %69, %70, %cst_30 {dimension_numbers = #tpu.dot_dimension_numbers<[1], [0], [0], [1], [0, 0, 1, 1], [], []>} : vector<8x32xf32>, vector<32x32xf32>, vector<8x32xf32> -> vector<8x32xf32>
    %c0_31 = arith.constant 0 : index
    %c0_32 = arith.constant 0 : index
    %72 = vector.load %arg6[%c0_31, %c0_32] : memref<1x32xf32, #tpu.memory_space<vmem>>, vector<1x32xf32>
    %73 = vector.broadcast %72 : vector<1x32xf32> to vector<8x32xf32>
    %74 = arith.addf %71, %73 : vector<8x32xf32>
    %c0_33 = arith.constant 0 : index
    %c0_34 = arith.constant 0 : index
    %c0_35 = arith.constant 0 : index
    %75 = vector.load %arg7[%c0_33, %c0_34, %c0_35] : memref<1x8x32xf32, #tpu.memory_space<vmem>>, vector<1x8x32xf32>
    %76 = vector.shape_cast %75 : vector<1x8x32xf32> to vector<8x32xf32>
    %77 = vector.shape_cast %74 : vector<8x32xf32> to vector<1x8x32xf32>
    tpu.vector_store %arg7[%c0_33, %c0_34, %c0_35], %77 {strides = array<i32>} : memref<1x8x32xf32, #tpu.memory_space<vmem>>, vector<1x8x32xf32>,
    return
  }
  func.func @transform_0(%arg0: i32, %arg1: i32) -> (i32, i32, i32) {
    %c0_i32 = arith.constant 0 : i32
    %c0_i32_0 = arith.constant 0 : i32
    %c0_i32_1 = arith.constant 0 : i32
    return %arg0, %c0_i32, %c0_i32_0 : i32, i32, i32
  }
  func.func @transform_1(%arg0: i32, %arg1: i32) -> (i32, i32) {
    %c0_i32 = arith.constant 0 : i32
    %c0_i32_0 = arith.constant 0 : i32
    %c0_i32_1 = arith.constant 0 : i32
    return %c0_i32, %c0_i32_0 : i32, i32
  }
  func.func @transform_2(%arg0: i32, %arg1: i32) -> (i32, i32) {
    %c0_i32 = arith.constant 0 : i32
    %c0_i32_0 = arith.constant 0 : i32
    %c0_i32_1 = arith.constant 0 : i32
    return %c0_i32, %c0_i32_0 : i32, i32
  }
  func.func @transform_3(%arg0: i32, %arg1: i32) -> (i32, i32) {
    %c0_i32 = arith.constant 0 : i32
    %c0_i32_0 = arith.constant 0 : i32
    %c0_i32_1 = arith.constant 0 : i32
    return %c0_i32, %c0_i32_0 : i32, i32
  }
  func.func @transform_4(%arg0: i32, %arg1: i32) -> (i32, i32) {
    %c0_i32 = arith.constant 0 : i32
    %c0_i32_0 = arith.constant 0 : i32
    %c0_i32_1 = arith.constant 0 : i32
    return %c0_i32, %c0_i32_0 : i32, i32
  }
  func.func @transform_5(%arg0: i32, %arg1: i32) -> (i32, i32, i32) {
    %c0_i32 = arith.constant 0 : i32
    %c0_i32_0 = arith.constant 0 : i32
    return %arg0, %arg1, %c0_i32 : i32, i32, i32
  }
}

</mosaic_0001>

<llo_original>
// kernel: tpu_custom_call.1
$region0: #{tpu_custom_call.1}
  #allocation0 [shape = 'u32[]', space=smem, size = 0x4, offset = 0x4, fixed_abs, tag = 'smem constant byte address 0x4 - core index']
  #allocation1 [shape = 'u32[72,128]{1,0:T(1,128)}', space=vmem, size = 0x9000, scoped, tag = 'internal scratch']
  #allocation2 [shape = 'f32[8,96]{1,0:T(8,128)}', space=vmem, size = 0x1000, scoped, tag = 'scratch operand']
  #allocation3 [shape = 'f32[8,32]{1,0:T(8,128)}', space=vmem, size = 0x1000, scoped, tag = 'scratch operand']
  %s0 = inlined_call_operand.hbm [shape: f32[2,8,32], index: 0, kind: input, shape index: {}]
  %s1 = inlined_call_operand.hbm [shape: f32[32,96], index: 1, kind: input, shape index: {}]
  %s2 = inlined_call_operand.vmem [shape: f32[1,96], index: 2, kind: input, shape index: {}]
  %s3 = inlined_call_operand.hbm [shape: f32[32,32], index: 3, kind: input, shape index: {}]
  %s4 = inlined_call_operand.vmem [shape: f32[1,32], index: 4, kind: input, shape index: {}]
  %s5 = inlined_call_operand.hbm [shape: f32[2,8,32], index: 5, kind: output, shape index: {}]
  %s6 = sld [smem:[#allocation0]]
  $region69: #{tpu_custom_call.1} parent=0
    _
  %s8 = ssub.s32 1, %s6
  %s9 = scalar_select 0, %s8, %s6
  $region1: #{tpu_custom_call.1} parent=0
    #allocation4 [shape = 'u8[8192]{0}', space=vmem, size = 0x2000, scoped, tag = 'input window, operand 0']
    #allocation5 [shape = 's32[2]{0}', space=sflag, size = 0x8, scoped, tag = 'scoped memory for tpu_custom_call.1']
    #allocation6 [shape = 's32[2]{0}', space=sflag, size = 0x8, scoped, tag = 'scoped memory for tpu_custom_call.1']
    #allocation7 [shape = 'u8[16384]{0}', space=vmem, size = 0x4000, scoped, tag = 'input window, operand 1, single buffered']
    #allocation8 [shape = 's32[1]{0}', space=sflag, size = 0x4, scoped, tag = 'scoped memory for tpu_custom_call.1']
    #allocation9 [shape = 'u8[16384]{0}', space=vmem, size = 0x4000, scoped, tag = 'input window, operand 3, single buffered']
    #allocation10 [shape = 'u8[8192]{0}', space=vmem, size = 0x2000, scoped, tag = 'output window, operand 0']
    %10 = vsyncpa [#allocation5], 0
    %s11 = scalar_lea.sflag [#allocation5], 1
    %12 = vsyncpa %s11, 0
    %13 = vsyncpa [#allocation8], 0
    %14 = vsyncpa [#allocation6], 0
    %s15 = scalar_lea.sflag [#allocation6], 1
    %16 = vsyncpa %s15, 0
    loop: start=0, step=1, limit=4
    $region2: #{tpu_custom_call.1} parent=1 // loop_pre_header
      _
    $region3: #{tpu_custom_call.1} parent=1 // loop_header
      %s18 = sphi 0, %s22
      %p19 = scmp.ge.s32.totalorder %s18, 4
      %s25 = sphi 0, %s37
      %s26 = sphi 0, %s33
      %s27 = sphi 0, %s25
      %s28 = sphi 0, %s26
      %s29 = sphi 0, %s27
      %s30 = sphi 0, %s28
      %s40 = sphi 0, %s42
      %s43 = sphi 0, %s40
      %s44 = sphi 0, %s43
      %s60 = sphi 0, %s44
      %s64 = sphi 0, %s64
      %s66 = sphi 0, %s64
      %s67 = sphi 0, %s66
      %s81 = sphi 0, %s67
      %s85 = sphi 0, %s85
      %s87 = sphi 0, %s85
      %s88 = sphi 0, %s87
      %s102 = sphi 0, %s88
      %s106 = sphi 0, %s106
      %s108 = sphi 0, %s106
      %s109 = sphi 0, %s108
      %s123 = sphi 0, %s109
      %s127 = sphi 0, %s127
      %s129 = sphi 0, %s127
      %s130 = sphi 0, %s129
      %s144 = sphi 0, %s130
      %s152 = sphi 0, %s154
      %s155 = sphi 0, %s152
      %s156 = sphi 0, %s155
      %s172 = sphi 0, %s156
    $region4: #{tpu_custom_call.1} parent=1 // loop_header_branch
      %21 = sbr.rel (%p19) target = $region8
    $region5: #{tpu_custom_call.1} parent=1 // loop_body
      %s23 = ssub.s32 %s18, 1
      %s24 = ssub.s32 %s18, 2
      %s31 = sadd.s32 1, %s26
      %p32 = scmp.ge.s32.totalorder %s31, 1
      %s33 = scalar_select %p32, 0, %s31
      %s34 = sadd.s32 1, %s25
      %s35 = scalar_select %p32, %s34, %s25
      %p36 = scmp.ge.s32.totalorder %s35, 2
      %s37 = scalar_select %p36, 0, %s35
      %s38 = ssub.s32 %s25, %s37
      %p39 = scmp.eq.s32.totalorder %s38, 0
      %s41 = sadd.s32 %s40, 1
      %s42 = scalar_select %p39, %s40, %s41
      %p45 = pneg %p39
      %p46 = scmp.eq.s32.totalorder %s18, 1
      %p47 = por %p45, %p46
      %p48 = scmp.ne.s32.totalorder %s40, %s43
      %p49 = scmp.eq.s32.totalorder %s18, 0
      %p50 = por %p48, %p49
      %p51 = scmp.ne.s32.totalorder %s40, %s43
      %p52 = scmp.eq.s32.totalorder %s23, 1
      %p53 = por %p51, %p52
      %p54 = scmp.ne.s32.totalorder %s43, %s44
      %p55 = scmp.eq.s32.totalorder %s23, 0
      %p56 = por %p54, %p55
      %p57 = scmp.ne.s32.totalorder %s43, %s44
      %p58 = scmp.eq.s32.totalorder %s24, 1
      %p59 = por %p57, %p58
      %p61 = scmp.ne.s32.totalorder %s44, %s60
      %p62 = scmp.eq.s32.totalorder %s24, 0
      %p63 = por %p61, %p62
      %s65 = sadd.s32 %s64, 1
      %p68 = scmp.eq.s32.totalorder %s18, 1
      %p69 = scmp.ne.s32.totalorder %s64, %s66
      %p70 = scmp.eq.s32.totalorder %s18, 0
      %p71 = por %p69, %p70
      %p72 = scmp.ne.s32.totalorder %s64, %s66
      %p73 = scmp.eq.s32.totalorder %s23, 1
      %p74 = por %p72, %p73
      %p75 = scmp.ne.s32.totalorder %s66, %s67
      %p76 = scmp.eq.s32.totalorder %s23, 0
      %p77 = por %p75, %p76
      %p78 = scmp.ne.s32.totalorder %s66, %s67
      %p79 = scmp.eq.s32.totalorder %s24, 1
      %p80 = por %p78, %p79
      %p82 = scmp.ne.s32.totalorder %s67, %s81
      %p83 = scmp.eq.s32.totalorder %s24, 0
      %p84 = por %p82, %p83
      %s86 = sadd.s32 %s85, 1
      %p89 = scmp.eq.s32.totalorder %s18, 1
      %p90 = scmp.ne.s32.totalorder %s85, %s87
      %p91 = scmp.eq.s32.totalorder %s18, 0
      %p92 = por %p90, %p91
      %p93 = scmp.ne.s32.totalorder %s85, %s87
      %p94 = scmp.eq.s32.totalorder %s23, 1
      %p95 = por %p93, %p94
      %p96 = scmp.ne.s32.totalorder %s87, %s88
      %p97 = scmp.eq.s32.totalorder %s23, 0
      %p98 = por %p96, %p97
      %p99 = scmp.ne.s32.totalorder %s87, %s88
      %p100 = scmp.eq.s32.totalorder %s24, 1
      %p101 = por %p99, %p100
      %p103 = scmp.ne.s32.totalorder %s88, %s102
      %p104 = scmp.eq.s32.totalorder %s24, 0
      %p105 = por %p103, %p104
      %s107 = sadd.s32 %s106, 1
      %p110 = scmp.eq.s32.totalorder %s18, 1
      %p111 = scmp.ne.s32.totalorder %s106, %s108
      %p112 = scmp.eq.s32.totalorder %s18, 0
      %p113 = por %p111, %p112
      %p114 = scmp.ne.s32.totalorder %s106, %s108
      %p115 = scmp.eq.s32.totalorder %s23, 1
      %p116 = por %p114, %p115
      %p117 = scmp.ne.s32.totalorder %s108, %s109
      %p118 = scmp.eq.s32.totalorder %s23, 0
      %p119 = por %p117, %p118
      %p120 = scmp.ne.s32.totalorder %s108, %s109
      %p121 = scmp.eq.s32.totalorder %s24, 1
      %p122 = por %p120, %p121
      %p124 = scmp.ne.s32.totalorder %s109, %s123
      %p125 = scmp.eq.s32.totalorder %s24, 0
      %p126 = por %p124, %p125
      %s128 = sadd.s32 %s127, 1
      %p131 = scmp.eq.s32.totalorder %s18, 1
      %p132 = scmp.ne.s32.totalorder %s127, %s129
      %p133 = scmp.eq.s32.totalorder %s18, 0
      %p134 = por %p132, %p133
      %p135 = scmp.ne.s32.totalorder %s127, %s129
      %p136 = scmp.eq.s32.totalorder %s23, 1
      %p137 = por %p135, %p136
      %p138 = scmp.ne.s32.totalorder %s129, %s130
      %p139 = scmp.eq.s32.totalorder %s23, 0
      %p140 = por %p138, %p139
      %p141 = scmp.ne.s32.totalorder %s129, %s130
      %p142 = scmp.eq.s32.totalorder %s24, 1
      %p143 = por %p141, %p142
      %p145 = scmp.ne.s32.totalorder %s130, %s144
      %p146 = scmp.eq.s32.totalorder %s24, 0
      %p147 = por %p145, %p146
      %s148 = ssub.s32 %s25, %s37
      %s149 = ssub.s32 %s26, %s33
      %s150 = sor.u32 %s148, %s149
      %p151 = scmp.eq.s32.totalorder %s150, 0
      %s153 = sadd.s32 %s152, 1
      %s154 = scalar_select %p151, %s152, %s153
      %p157 = pneg %p151
      %p158 = scmp.eq.s32.totalorder %s18, 1
      %p159 = por %p157, %p158
      %p160 = scmp.ne.s32.totalorder %s152, %s155
      %p161 = scmp.eq.s32.totalorder %s18, 0
      %p162 = por %p160, %p161
      %p163 = scmp.ne.s32.totalorder %s152, %s155
      %p164 = scmp.eq.s32.totalorder %s23, 1
      %p165 = por %p163, %p164
      %p166 = scmp.ne.s32.totalorder %s155, %s156
      %p167 = scmp.eq.s32.totalorder %s23, 0
      %p168 = por %p166, %p167
      %p169 = scmp.ne.s32.totalorder %s155, %s156
      %p170 = scmp.eq.s32.totalorder %s24, 1
      %p171 = por %p169, %p170
      %p173 = scmp.ne.s32.totalorder %s156, %s172
      %p174 = scmp.eq.s32.totalorder %s24, 0
      %p175 = por %p173, %p174
      %p176 = scmp.le.s32.totalorder 1, %s18
      %p177 = scmp.lt.s32.totalorder %s18, 3
      %p178 = pnand %p176, %p177
      %p179 = pneg %p178
      // Predicated region
      $region9: #{tpu_custom_call.1} parent=5 // pred_check
        _
      $region10: #{tpu_custom_call.1} parent=5 // pred_check_branch
        %181 = sbr.rel (%p178) target = $region12
      $region11: #{tpu_custom_call.1} parent=5 // pred_region
        %s182 = ssub.s32 %s18, 1
        // Predicated region
        $region13: #{tpu_custom_call.1} parent=11 // pred_check
          %p183 = pneg %p77
        $region14: #{tpu_custom_call.1} parent=11 // pred_check_branch
          %185 = sbr.rel (%p183) target = $region16
        $region15: #{tpu_custom_call.1} parent=11 // pred_region
          %187 = vsyncadd [#allocation8], 0
          %s188 = sshll.u32 %s1, 4
          %s189 = int_to_ptr.hbm [resolvable:$true] %s188
          %s190 = sshll.u32 [#allocation7], 4
          %s191 = int_to_ptr.vmem [resolvable:$true] %s190
          %196 = dma.hbm_to_vmem [thread:$0]  %s189, 512, %s191, [#allocation8], 128, 128, 8
        $region16: #{tpu_custom_call.1} parent=11 // pred_fallthru
          _
        // Predicated region
        $region17: #{tpu_custom_call.1} parent=11 // pred_check
          %p197 = pneg %p98
        $region18: #{tpu_custom_call.1} parent=11 // pred_check_branch
          %199 = sbr.rel (%p197) target = $region20
        $region19: #{tpu_custom_call.1} parent=11 // pred_region
          _
        $region20: #{tpu_custom_call.1} parent=11 // pred_fallthru
          _
        // Predicated region
        $region21: #{tpu_custom_call.1} parent=11 // pred_check
          %p200 = pneg %p119
        $region22: #{tpu_custom_call.1} parent=11 // pred_check_branch
          %202 = sbr.rel (%p200) target = $region24
        $region23: #{tpu_custom_call.1} parent=11 // pred_region
          %204 = vsyncadd [#allocation8], 0
          %s205 = sshll.u32 %s3, 4
          %s206 = int_to_ptr.hbm [resolvable:$true] %s205
          %s207 = sshll.u32 [#allocation9], 4
          %s208 = int_to_ptr.vmem [resolvable:$true] %s207
          %213 = dma.hbm_to_vmem [thread:$0]  %s206, 512, %s208, [#allocation8], 128, 128, 8
        $region24: #{tpu_custom_call.1} parent=11 // pred_fallthru
          _
        // Predicated region
        $region25: #{tpu_custom_call.1} parent=11 // pred_check
          %p214 = pneg %p140
        $region26: #{tpu_custom_call.1} parent=11 // pred_check_branch
          %216 = sbr.rel (%p214) target = $region28
        $region27: #{tpu_custom_call.1} parent=11 // pred_region
          _
        $region28: #{tpu_custom_call.1} parent=11 // pred_fallthru
          _
      $region12: #{tpu_custom_call.1} parent=5 // pred_fallthru
        _
      %p217 = scmp.lt.s32.totalorder %s18, 2
      // Predicated region
      $region29: #{tpu_custom_call.1} parent=5 // pred_check
        %p218 = pneg %p217
      $region30: #{tpu_custom_call.1} parent=5 // pred_check_branch
        %220 = sbr.rel (%p218) target = $region32
      $region31: #{tpu_custom_call.1} parent=5 // pred_region
        // Predicated region
        $region33: #{tpu_custom_call.1} parent=31 // pred_check
          %p221 = pneg %p50
        $region34: #{tpu_custom_call.1} parent=31 // pred_check_branch
          %223 = sbr.rel (%p221) target = $region36
        $region35: #{tpu_custom_call.1} parent=31 // pred_region
          %s224 = sand.u32 %s40, 1
          %s225 = scalar_lea.sflag [#allocation5], %s224
          %s226 = sand.u32 %s40, 1
          %s227 = smul.addr %s226, 8
          %s228 = scalar_lea.vmem [#allocation4], %s227
          %230 = vsyncadd %s225, 0
          %s231 = smul.addr %s25, 8
          %s232 = scalar_lea.hbm %s0, %s231
          %s234 = sshll.u32 %s232, 4
          %s235 = int_to_ptr.hbm [resolvable:$true] %s234
          %s236 = sshll.u32 %s228, 4
          %s237 = int_to_ptr.vmem [resolvable:$true] %s236
          %239 = dma.hbm_to_vmem [thread:$0]  %s235, 128, %s237, %s225
        $region36: #{tpu_custom_call.1} parent=31 // pred_fallthru
          _
      $region32: #{tpu_custom_call.1} parent=5 // pred_fallthru
        _
      %p240 = scmp.le.s32.totalorder 1, %s18
      %p241 = scmp.lt.s32.totalorder %s18, 3
      %p242 = pnand %p240, %p241
      %p243 = pneg %p242
      // Predicated region
      $region37: #{tpu_custom_call.1} parent=5 // pred_check
        _
      $region38: #{tpu_custom_call.1} parent=5 // pred_check_branch
        %245 = sbr.rel (%p242) target = $region40
      $region39: #{tpu_custom_call.1} parent=5 // pred_region
        %s246 = ssub.s32 %s18, 1
        %s247 = sand.u32 %s43, 1
        %s248 = scalar_lea.sflag [#allocation5], %s247
        %s249 = sand.u32 %s43, 1
        %s250 = smul.addr %s249, 8
        %s251 = scalar_lea.vmem [#allocation4], %s250
        // Predicated region
        $region41: #{tpu_custom_call.1} parent=39 // pred_check
          %p252 = pneg %p56
        $region42: #{tpu_custom_call.1} parent=39 // pred_check_branch
          %254 = sbr.rel (%p252) target = $region44
        $region43: #{tpu_custom_call.1} parent=39 // pred_region
          %256 = dma.done %s248, 128
        $region44: #{tpu_custom_call.1} parent=39 // pred_fallthru
          _
        // Predicated region
        $region45: #{tpu_custom_call.1} parent=39 // pred_check
          %p257 = pneg %p77
        $region46: #{tpu_custom_call.1} parent=39 // pred_check_branch
          %259 = sbr.rel (%p257) target = $region48
        $region47: #{tpu_custom_call.1} parent=39 // pred_region
          %261 = dma.done [#allocation8], 512
        $region48: #{tpu_custom_call.1} parent=39 // pred_fallthru
          _
        // Predicated region
        $region49: #{tpu_custom_call.1} parent=39 // pred_check
          %p262 = pneg %p119
        $region50: #{tpu_custom_call.1} parent=39 // pred_check_branch
          %264 = sbr.rel (%p262) target = $region52
        $region51: #{tpu_custom_call.1} parent=39 // pred_region
          %266 = dma.done [#allocation8], 512
        $region52: #{tpu_custom_call.1} parent=39 // pred_fallthru
          _
        %s267 = sand.u32 %s43, 1
        %s268 = scalar_lea.sflag [#allocation5], %s267
        %s269 = sand.u32 %s43, 1
        %s270 = smul.addr %s269, 8
        %s271 = scalar_lea.vmem [#allocation4], %s270
        %p272 = pneg %p56
        %p273 = pneg %p53
        %p274 = pneg %p77
        %p275 = pneg %p74
        %p276 = pneg %p98
        %p277 = pneg %p95
        %p278 = pneg %p119
        %p279 = pneg %p116
        %p280 = pneg %p140
        %p281 = pneg %p137
        %p282 = pneg %p168
        %p283 = pneg %p165
        %s284 = sand.u32 %s155, 1
        %s285 = scalar_lea.sflag [#allocation6], %s284
        %s286 = sand.u32 %s155, 1
        %s287 = smul.addr %s286, 8
        %s288 = scalar_lea.vmem [#allocation10], %s287
        %p289 = scmp.eq.s32.totalorder %s28, 0
        // Predicated region
        $region53: #{tpu_custom_call.1} parent=39 // pred_check
          %p290 = pneg %p289
        $region54: #{tpu_custom_call.1} parent=39 // pred_check_branch
          %292 = sbr.rel (%p290) target = $region56
        $region55: #{tpu_custom_call.1} parent=39 // pred_region
          %v293 = vld [vmem:[%s251] sm:$0xff]
          %v294 = vld [vmem:[#allocation7] sm:$0xff]
          %v295 = vld [vmem:[#allocation7 + $0x8] sm:$0xff]
          %v296 = vld [vmem:[#allocation7 + $0x10] sm:$0xff]
          %v297 = vld [vmem:[#allocation7 + $0x18] sm:$0xff]
          %v298 = vld [vmem:[%s2] sm:$0x1]
          %v300 = vperm.slane %v298, 0
          %vm302 = vcmask 261120
          %v304 = vsel %vm302, %v293, 0
          %306 = vmatpush.msra.mxu0 0.0
          %307 = vmatpush.msra.mxu0 0.0
          %308 = vmatpush.msra.mxu0 0.0
          %309 = vmatpush.msra.mxu0 0.0
          %310 = vmatpush.msra.mxu0 0.0
          %311 = vmatpush.msra.mxu0 0.0
          %312 = vmatpush.msra.mxu0 0.0
          %313 = vmatpush.msra.mxu0 0.0
          %314 = vmatpush.msra.mxu0 0.0
          %315 = vmatpush.msra.mxu0 0.0
          %316 = vmatpush.msra.mxu0 0.0
          %317 = vmatpush.msra.mxu0 0.0
          %318 = vmatpush.msra.mxu0 %v297
          %319 = vmatpush.msra.mxu0 %v296
          %320 = vmatpush.msra.mxu0 %v295
          %321 = vmatpush.msra.mxu0 %v294
          %322 = vmatmul.f32.gmra.mxu0 %v304
          %v323 = vpop.f32.mrf.mxu0
          %v324 = vadd.f32 %v300, %v323
          %325 = vdwg.mxu0
          %vm326 = vcmask 785408
          %327 = vst.msk [vmem:[#allocation2] sm:$0xff] %vm326, %v324
        $region56: #{tpu_custom_call.1} parent=39 // pred_fallthru
          _
        %s328 = smul.u32 %s28, 8
        %s329 = scalar_lea.vmem [#allocation2], %s328
        %v330 = vld [vmem:[%s329] sm:$0xff]
        %v331 = vld [vmem:[#allocation2] sm:$0xff]
        %333 = vrot.lane.b32.xlu0 %v331, 96
        %v334 = vpop.permute.xlu0 %333
        %vm335 = vcmask 64512
        %v337 = vsel %vm335, %v330, 0
        %v339 = vsel %vm335, %v334, 0
        %341 = vmatpush.xpose.msra.mxu0 0.0
        %342 = vmatpush.xpose.msra.mxu0 0.0
        %343 = vmatpush.xpose.msra.mxu0 0.0
        %344 = vmatpush.xpose.msra.mxu0 0.0
        %345 = vmatpush.xpose.msra.mxu0 0.0
        %346 = vmatpush.xpose.msra.mxu0 0.0
        %347 = vmatpush.xpose.msra.mxu0 0.0
        %348 = vmatpush.xpose.msra.mxu0 0.0
        %349 = vmatpush.xpose.msra.mxu0 0.0
        %350 = vmatpush.xpose.msra.mxu0 0.0
        %351 = vmatpush.xpose.msra.mxu0 0.0
        %352 = vmatpush.xpose.msra.mxu0 0.0
        %353 = vmatpush.xpose.msra.mxu0 0.0
        %354 = vmatpush.xpose.msra.mxu0 0.0
        %355 = vmatpush.xpose.msra.mxu0 0.0
        %356 = vmatpush.xpose.msra.mxu0 %v339
        %357 = vmatmul.f32.gmra.mxu0 %v337
        %v358 = vpop.f32.mrf.mxu0
        %v359 = vadd.f32 0.0, %v358
        %360 = vdwg.mxu0
        %v361 = vsel %vm335, %v359, -inf
        %362 = vmax.xlane.f32.xlu0 %v361
        %v363 = vpop.xlane.xlu0 %362
        %v364 = vsub.f32 %v359, %v363
        %v365 = vmul.f32 %v364, 1.442695
        %v366 = vpow.pop %v365
        %v367 = vsel %vm335, %v366, 0.0
        %368 = vadd.xlane.f32.xlu0 %v367
        %v369 = vpop.xlane.xlu0 %368
        %370 = vrot.lane.b32.xlu0 %v331, 64
        %v371 = vpop.permute.xlu0 %370
        %v374 = vsel %vm335, %v366, 0
        %376 = vmatpush.msra.mxu0 0.0
        %377 = vmatpush.msra.mxu0 0.0
        %378 = vmatpush.msra.mxu0 0.0
        %379 = vmatpush.msra.mxu0 0.0
        %380 = vmatpush.msra.mxu0 0.0
        %381 = vmatpush.msra.mxu0 0.0
        %382 = vmatpush.msra.mxu0 0.0
        %383 = vmatpush.msra.mxu0 0.0
        %384 = vmatpush.msra.mxu0 0.0
        %385 = vmatpush.msra.mxu0 0.0
        %386 = vmatpush.msra.mxu0 0.0
        %387 = vmatpush.msra.mxu0 0.0
        %388 = vmatpush.msra.mxu0 0.0
        %389 = vmatpush.msra.mxu0 0.0
        %390 = vmatpush.msra.mxu0 0.0
        %391 = vmatpush.msra.mxu0 %v371
        %392 = vmatmul.f32.gmra.mxu0 %v374
        %v393 = vpop.f32.mrf.mxu0
        %v394 = vadd.f32 0.0, %v393
        %395 = vdwg.mxu0
        %v396 = vrcp.pop %v369
        %v397 = vmul.f32 %v394, %v396
        %398 = vrot.lane.b32.xlu0 %v330, 120
        %v399 = vpop.permute.xlu0 %398
        %400 = vrot.lane.b32.xlu0 %v331, 88
        %v401 = vpop.permute.xlu0 %400
        %v402 = vsel %vm335, %v399, 0
        %v404 = vsel %vm335, %v401, 0
        %406 = vmatpush.xpose.msra.mxu0 0.0
        %407 = vmatpush.xpose.msra.mxu0 0.0
        %408 = vmatpush.xpose.msra.mxu0 0.0
        %409 = vmatpush.xpose.msra.mxu0 0.0
        %410 = vmatpush.xpose.msra.mxu0 0.0
        %411 = vmatpush.xpose.msra.mxu0 0.0
        %412 = vmatpush.xpose.msra.mxu0 0.0
        %413 = vmatpush.xpose.msra.mxu0 0.0
        %414 = vmatpush.xpose.msra.mxu0 0.0
        %415 = vmatpush.xpose.msra.mxu0 0.0
        %416 = vmatpush.xpose.msra.mxu0 0.0
        %417 = vmatpush.xpose.msra.mxu0 0.0
        %418 = vmatpush.xpose.msra.mxu0 0.0
        %419 = vmatpush.xpose.msra.mxu0 0.0
        %420 = vmatpush.xpose.msra.mxu0 0.0
        %421 = vmatpush.xpose.msra.mxu0 %v404
        %422 = vmatmul.f32.gmra.mxu0 %v402
        %v423 = vpop.f32.mrf.mxu0
        %v424 = vadd.f32 0.0, %v423
        %425 = vdwg.mxu0
        %v426 = vsel %vm335, %v424, -inf
        %427 = vmax.xlane.f32.xlu0 %v426
        %v428 = vpop.xlane.xlu0 %427
        %v429 = vsub.f32 %v424, %v428
        %v430 = vmul.f32 %v429, 1.442695
        %v431 = vpow.pop %v430
        %v432 = vsel %vm335, %v431, 0.0
        %433 = vadd.xlane.f32.xlu0 %v432
        %v434 = vpop.xlane.xlu0 %433
        %435 = vrot.lane.b32.xlu0 %v331, 56
        %v436 = vpop.permute.xlu0 %435
        %v439 = vsel %vm335, %v431, 0
        %441 = vmatpush.msra.mxu0 0.0
        %442 = vmatpush.msra.mxu0 0.0
        %443 = vmatpush.msra.mxu0 0.0
        %444 = vmatpush.msra.mxu0 0.0
        %445 = vmatpush.msra.mxu0 0.0
        %446 = vmatpush.msra.mxu0 0.0
        %447 = vmatpush.msra.mxu0 0.0
        %448 = vmatpush.msra.mxu0 0.0
        %449 = vmatpush.msra.mxu0 0.0
        %450 = vmatpush.msra.mxu0 0.0
        %451 = vmatpush.msra.mxu0 0.0
        %452 = vmatpush.msra.mxu0 0.0
        %453 = vmatpush.msra.mxu0 0.0
        %454 = vmatpush.msra.mxu0 0.0
        %455 = vmatpush.msra.mxu0 0.0
        %456 = vmatpush.msra.mxu0 %v436
        %457 = vmatmul.f32.gmra.mxu0 %v439
        %v458 = vpop.f32.mrf.mxu0
        %v459 = vadd.f32 0.0, %v458
        %460 = vdwg.mxu0
        %v461 = vrcp.pop %v434
        %v462 = vmul.f32 %v459, %v461
        %463 = vrot.lane.b32.xlu0 %v330, 112
        %v464 = vpop.permute.xlu0 %463
        %465 = vrot.lane.b32.xlu0 %v331, 80
        %v466 = vpop.permute.xlu0 %465
        %v467 = vsel %vm335, %v464, 0
        %v469 = vsel %vm335, %v466, 0
        %471 = vmatpush.xpose.msra.mxu0 0.0
        %472 = vmatpush.xpose.msra.mxu0 0.0
        %473 = vmatpush.xpose.msra.mxu0 0.0
        %474 = vmatpush.xpose.msra.mxu0 0.0
        %475 = vmatpush.xpose.msra.mxu0 0.0
        %476 = vmatpush.xpose.msra.mxu0 0.0
        %477 = vmatpush.xpose.msra.mxu0 0.0
        %478 = vmatpush.xpose.msra.mxu0 0.0
        %479 = vmatpush.xpose.msra.mxu0 0.0
        %480 = vmatpush.xpose.msra.mxu0 0.0
        %481 = vmatpush.xpose.msra.mxu0 0.0
        %482 = vmatpush.xpose.msra.mxu0 0.0
        %483 = vmatpush.xpose.msra.mxu0 0.0
        %484 = vmatpush.xpose.msra.mxu0 0.0
        %485 = vmatpush.xpose.msra.mxu0 0.0
        %486 = vmatpush.xpose.msra.mxu0 %v469
        %487 = vmatmul.f32.gmra.mxu0 %v467
        %v488 = vpop.f32.mrf.mxu0
        %v489 = vadd.f32 0.0, %v488
        %490 = vdwg.mxu0
        %v491 = vsel %vm335, %v489, -inf
        %492 = vmax.xlane.f32.xlu0 %v491
        %v493 = vpop.xlane.xlu0 %492
        %v494 = vsub.f32 %v489, %v493
        %v495 = vmul.f32 %v494, 1.442695
        %v496 = vpow.pop %v495
        %v497 = vsel %vm335, %v496, 0.0
        %498 = vadd.xlane.f32.xlu0 %v497
        %v499 = vpop.xlane.xlu0 %498
        %500 = vrot.lane.b32.xlu0 %v331, 48
        %v501 = vpop.permute.xlu0 %500
        %v504 = vsel %vm335, %v496, 0
        %506 = vmatpush.msra.mxu0 0.0
        %507 = vmatpush.msra.mxu0 0.0
        %508 = vmatpush.msra.mxu0 0.0
        %509 = vmatpush.msra.mxu0 0.0
        %510 = vmatpush.msra.mxu0 0.0
        %511 = vmatpush.msra.mxu0 0.0
        %512 = vmatpush.msra.mxu0 0.0
        %513 = vmatpush.msra.mxu0 0.0
        %514 = vmatpush.msra.mxu0 0.0
        %515 = vmatpush.msra.mxu0 0.0
        %516 = vmatpush.msra.mxu0 0.0
        %517 = vmatpush.msra.mxu0 0.0
        %518 = vmatpush.msra.mxu0 0.0
        %519 = vmatpush.msra.mxu0 0.0
        %520 = vmatpush.msra.mxu0 0.0
        %521 = vmatpush.msra.mxu0 %v501
        %522 = vmatmul.f32.gmra.mxu0 %v504
        %v523 = vpop.f32.mrf.mxu0
        %v524 = vadd.f32 0.0, %v523
        %525 = vdwg.mxu0
        %v526 = vrcp.pop %v499
        %v527 = vmul.f32 %v524, %v526
        %528 = vrot.lane.b32.xlu0 %v330, 104
        %v529 = vpop.permute.xlu0 %528
        %530 = vrot.lane.b32.xlu0 %v331, 72
        %v531 = vpop.permute.xlu0 %530
        %v532 = vsel %vm335, %v529, 0
        %v534 = vsel %vm335, %v531, 0
        %536 = vmatpush.xpose.msra.mxu0 0.0
        %537 = vmatpush.xpose.msra.mxu0 0.0
        %538 = vmatpush.xpose.msra.mxu0 0.0
        %539 = vmatpush.xpose.msra.mxu0 0.0
        %540 = vmatpush.xpose.msra.mxu0 0.0
        %541 = vmatpush.xpose.msra.mxu0 0.0
        %542 = vmatpush.xpose.msra.mxu0 0.0
        %543 = vmatpush.xpose.msra.mxu0 0.0
        %544 = vmatpush.xpose.msra.mxu0 0.0
        %545 = vmatpush.xpose.msra.mxu0 0.0
        %546 = vmatpush.xpose.msra.mxu0 0.0
        %547 = vmatpush.xpose.msra.mxu0 0.0
        %548 = vmatpush.xpose.msra.mxu0 0.0
        %549 = vmatpush.xpose.msra.mxu0 0.0
        %550 = vmatpush.xpose.msra.mxu0 0.0
        %551 = vmatpush.xpose.msra.mxu0 %v534
        %552 = vmatmul.f32.gmra.mxu0 %v532
        %v553 = vpop.f32.mrf.mxu0
        %v554 = vadd.f32 0.0, %v553
        %555 = vdwg.mxu0
        %v556 = vsel %vm335, %v554, -inf
        %557 = vmax.xlane.f32.xlu0 %v556
        %v558 = vpop.xlane.xlu0 %557
        %v559 = vsub.f32 %v554, %v558
        %v560 = vmul.f32 %v559, 1.442695
        %v561 = vpow.pop %v560
        %v562 = vsel %vm335, %v561, 0.0
        %563 = vadd.xlane.f32.xlu0 %v562
        %v564 = vpop.xlane.xlu0 %563
        %565 = vrot.lane.b32.xlu0 %v331, 40
        %v566 = vpop.permute.xlu0 %565
        %v569 = vsel %vm335, %v561, 0
        %571 = vmatpush.msra.mxu0 0.0
        %572 = vmatpush.msra.mxu0 0.0
        %573 = vmatpush.msra.mxu0 0.0
        %574 = vmatpush.msra.mxu0 0.0
        %575 = vmatpush.msra.mxu0 0.0
        %576 = vmatpush.msra.mxu0 0.0
        %577 = vmatpush.msra.mxu0 0.0
        %578 = vmatpush.msra.mxu0 0.0
        %579 = vmatpush.msra.mxu0 0.0
        %580 = vmatpush.msra.mxu0 0.0
        %581 = vmatpush.msra.mxu0 0.0
        %582 = vmatpush.msra.mxu0 0.0
        %583 = vmatpush.msra.mxu0 0.0
        %584 = vmatpush.msra.mxu0 0.0
        %585 = vmatpush.msra.mxu0 0.0
        %586 = vmatpush.msra.mxu0 %v566
        %587 = vmatmul.f32.gmra.mxu0 %v569
        %v588 = vpop.f32.mrf.mxu0
        %v589 = vadd.f32 0.0, %v588
        %590 = vdwg.mxu0
        %v591 = vrcp.pop %v564
        %v592 = vmul.f32 %v589, %v591
        %594 = vrot.lane.b32.xlu0 %v462, 8
        %v595 = vpop.permute.xlu0 %594
        %598 = vrot.lane.b32.xlu0 %v527, 16
        %v599 = vpop.permute.xlu0 %598
        %602 = vrot.lane.b32.xlu0 %v592, 24
        %v603 = vpop.permute.xlu0 %602
        %v605 = vsel %vm335, %v397, %v595
        %vm606 = vcmask 130048
        %v607 = vsel %vm606, %v605, %v599
        %vm608 = vcmask 195584
        %v609 = vsel %vm608, %v607, %v603
        %vm610 = vcmask 261120
        %611 = vst.msk [vmem:[#allocation3] sm:$0xff] %vm610, %v609
        %v612 = vld [vmem:[#allocation3] sm:$0xff]
        %v613 = vld [vmem:[#allocation9] sm:$0xff]
        %v614 = vld [vmem:[#allocation9 + $0x8] sm:$0xff]
        %v615 = vld [vmem:[#allocation9 + $0x10] sm:$0xff]
        %v616 = vld [vmem:[#allocation9 + $0x18] sm:$0xff]
        %v617 = vld [vmem:[%s4] sm:$0x1]
        %v619 = vperm.slane %v617, 0
        %v622 = vsel %vm610, %v612, 0
        %624 = vmatpush.msra.mxu0 0.0
        %625 = vmatpush.msra.mxu0 0.0
        %626 = vmatpush.msra.mxu0 0.0
        %627 = vmatpush.msra.mxu0 0.0
        %628 = vmatpush.msra.mxu0 0.0
        %629 = vmatpush.msra.mxu0 0.0
        %630 = vmatpush.msra.mxu0 0.0
        %631 = vmatpush.msra.mxu0 0.0
        %632 = vmatpush.msra.mxu0 0.0
        %633 = vmatpush.msra.mxu0 0.0
        %634 = vmatpush.msra.mxu0 0.0
        %635 = vmatpush.msra.mxu0 0.0
        %636 = vmatpush.msra.mxu0 %v616
        %637 = vmatpush.msra.mxu0 %v615
        %638 = vmatpush.msra.mxu0 %v614
        %639 = vmatpush.msra.mxu0 %v613
        %640 = vmatmul.f32.gmra.mxu0 %v622
        %v641 = vpop.f32.mrf.mxu0
        %v642 = vadd.f32 %v619, %v641
        %643 = vdwg.mxu0
        %644 = vst.msk [vmem:[%s288] sm:$0xff] %vm610, %v642
        %s645 = sand.u32 %s155, 1
        %s646 = scalar_lea.sflag [#allocation6], %s645
        %s647 = sand.u32 %s155, 1
        %s648 = smul.addr %s647, 8
        %s649 = scalar_lea.vmem [#allocation10], %s648
        // Predicated region
        $region57: #{tpu_custom_call.1} parent=39 // pred_check
          %p650 = pneg %p165
        $region58: #{tpu_custom_call.1} parent=39 // pred_check_branch
          %652 = sbr.rel (%p650) target = $region60
        $region59: #{tpu_custom_call.1} parent=39 // pred_region
          %654 = vsyncadd %s646, 0
          %s655 = sadd.s32 %s28, %s27
          %s656 = smul.addr %s655, 8
          %s657 = scalar_lea.hbm %s5, %s656
          %s659 = sshll.u32 %s649, 4
          %s660 = int_to_ptr.vmem [resolvable:$true] %s659
          %s661 = sshll.u32 %s657, 4
          %s662 = int_to_ptr.hbm [resolvable:$true] %s661
          %664 = dma.vmem_to_hbm [thread:$0]  %s660, 128, %s662, %s646
        $region60: #{tpu_custom_call.1} parent=39 // pred_fallthru
          _
      $region40: #{tpu_custom_call.1} parent=5 // pred_fallthru
        _
      %p665 = scmp.le.s32.totalorder 2, %s18
      // Predicated region
      $region61: #{tpu_custom_call.1} parent=5 // pred_check
        %p666 = pneg %p665
      $region62: #{tpu_custom_call.1} parent=5 // pred_check_branch
        %668 = sbr.rel (%p666) target = $region64
      $region63: #{tpu_custom_call.1} parent=5 // pred_region
        %s669 = ssub.s32 %s18, 2
        // Predicated region
        $region65: #{tpu_custom_call.1} parent=63 // pred_check
          %p670 = pneg %p171
        $region66: #{tpu_custom_call.1} parent=63 // pred_check_branch
          %672 = sbr.rel (%p670) target = $region68
        $region67: #{tpu_custom_call.1} parent=63 // pred_region
          %s673 = sand.u32 %s156, 1
          %s674 = scalar_lea.sflag [#allocation6], %s673
          %s675 = sand.u32 %s156, 1
          %s676 = smul.addr %s675, 8
          %s677 = scalar_lea.vmem [#allocation10], %s676
          %679 = dma.done %s674, 128
        $region68: #{tpu_custom_call.1} parent=63 // pred_fallthru
          _
      $region64: #{tpu_custom_call.1} parent=5 // pred_fallthru
        _
    $region6: #{tpu_custom_call.1} parent=1 // loop_footer
      %s22 = sadd.s32 1, %s18
    $region7: #{tpu_custom_call.1} parent=1 // loop_footer_branch
      %17 = sbr.rel target = $region3
    $region8: #{tpu_custom_call.1} parent=1 // loop_exit
      _
    %680 = vsyncpa [#allocation5], 1
    %s681 = scalar_lea.sflag [#allocation5], 1
    %682 = vsyncpa %s681, 1
    %683 = vsyncpa [#allocation8], 1
    %684 = vsyncpa [#allocation6], 1
    %s685 = scalar_lea.sflag [#allocation6], 1
    %686 = vsyncpa %s685, 1

</llo_original>
